<compile_context>
chip_gen: v5e
topology: v5e:2x2
jax: 0.10.0
libtpu: 0.0.40
codegen_flags: <defaults>
</compile_context>

<pallas_src>
import jax
import jax.numpy as jnp
from jax.experimental import pallas as pl
from jax.experimental.pallas import tpu as pltpu

BN_EPS = 1e-5
_VMEM_LIMIT_BYTES = 32 * 1024 * 1024


def _round_up(x, m):
    return (x + m - 1) // m * m


def _pick_pixel_tiling(hw, cin_p):
    """Return (tile, hw_p): lane tile (multiple of 128) and padded pixel count.

    Keeps the double-buffered f32 X block well under the VMEM limit and avoids
    padding the pixel dim beyond 128-alignment whenever a decent divisor exists.
    """
    budget = 12 * 1024 * 1024                       # bytes for 2 * cin_p * tile * 4
    cap = max(512, min(8192, (budget // (8 * cin_p)) // 128 * 128))
    hw128 = _round_up(hw, 128)
    if hw128 <= cap:
        return hw128, hw128                         # one tile per image
    q = hw128 // 128
    best = 1
    for d in range(1, cap // 128 + 1):
        if q % d == 0:
            best = d
    tile = best * 128
    if tile < 1024:
        # No decent divisor: accept < tile extra padding to keep tiles large.
        tile = min(cap, 4096)
        return tile, _round_up(hw128, tile)
    return tile, hw128


# --------------------------------------------------------------------------
# Pass 1: lane-dense 1x1 conv (no bias) + per-image channel sum / sum-of-sq
# --------------------------------------------------------------------------
def _conv_stats_kernel(w_ref, x_ref, t_ref, psum_ref, psq_ref, acc_sum, acc_sq):
    # w_ref:    (Cout_p, Cin_p)  bf16, constant block index -> stays resident
    # x_ref:    (Cin_p, TILE_M)  f32 pixel tile (lanes = pixels); cast in-kernel
    # t_ref:    (Cout_p, TILE_M) bf16 conv output tile (bias NOT added)
    # psum_ref: (Cout_p, 1)      f32 per-image channel sum   (written at last j)
    # psq_ref:  (Cout_p, 1)      f32 per-image channel sumsq (written at last j)
    # acc_*:    VMEM scratch accumulators, reset per image (j == 0)
    j = pl.program_id(1)

    @pl.when(j == 0)
    def _init():
        acc_sum[...] = jnp.zeros_like(acc_sum)
        acc_sq[...] = jnp.zeros_like(acc_sq)

    # 1x1 conv == (Cout, Cin) @ (Cin, M) matmul on the MXU, f32 accumulation.
    x_bf16 = x_ref[...].astype(jnp.bfloat16)
    t = jnp.dot(w_ref[...], x_bf16, preferred_element_type=jnp.float32)
    t_ref[...] = t.astype(t_ref.dtype)              # bf16 intermediate to HBM

    # Stats from the f32 value (before the bf16 downcast).
    acc_sum[...] += jnp.sum(t, axis=1, keepdims=True)
    acc_sq[...] += jnp.sum(t * t, axis=1, keepdims=True)

    @pl.when(j == pl.num_programs(1) - 1)
    def _finalize():
        psum_ref[...] = acc_sum[...]
        psq_ref[...] = acc_sq[...]


# --------------------------------------------------------------------------
# Pass 2: folded BatchNorm (per-channel scale/shift) + ReLU, unpadded Cout out
# --------------------------------------------------------------------------
def _bn_relu_kernel(t_ref, a_ref, c_ref, o_ref):
    # t_ref: (Cout_p, TILE_M) bf16; a_ref/c_ref: (Cout, 1) f32; o_ref: (Cout, TILE_M)
    cout = o_ref.shape[0]
    t = t_ref[...].astype(jnp.float32)[:cout, :]
    o_ref[...] = jnp.maximum(t * a_ref[...] + c_ref[...], 0.0)


def lin_forward(x_nchw, weight, bias, gamma, beta):
    """Fused Conv2d(1x1) + BatchNorm2d(training stats) + ReLU.

    x_nchw: (N, Cin, H, W) f32; weight: (Cout, Cin); bias/gamma/beta: (Cout,).
    Returns (N, Cout, H, W) f32.  (bias cancels exactly under training-mode BN.)
    """
    del bias  # cancels inside BatchNorm (training-mode batch statistics)
    n, cin, h, w = x_nchw.shape
    cout = weight.shape[0]
    hw = h * w

    cin_p = _round_up(cin, 8)
    cout_p = _round_up(cout, 8)
    tile, hw_p = _pick_pixel_tiling(hw, cin_p)
    n_tiles = hw_p // tile
    grid = (n, n_tiles)

    # NCHW is already channel-major -> reshape only; keep f32 (cast in-kernel).
    x3 = x_nchw.reshape(n, cin, hw)
    if cin_p != cin or hw_p != hw:
        x3 = jnp.pad(x3, ((0, 0), (0, cin_p - cin), (0, hw_p - hw)))

    w_p = weight.astype(jnp.bfloat16)               # tiny
    if (cout_p, cin_p) != (cout, cin):
        w_p = jnp.pad(w_p, ((0, cout_p - cout), (0, cin_p - cin)))

    # ------------- pass 1: T = W @ X (bf16 out) + per-image channel stats ----
    t_hbm, psum, psq = pl.pallas_call(
        _conv_stats_kernel,
        out_shape=(
            jax.ShapeDtypeStruct((n, cout_p, hw_p), jnp.bfloat16),
            jax.ShapeDtypeStruct((n, cout_p, 1), jnp.float32),
            jax.ShapeDtypeStruct((n, cout_p, 1), jnp.float32),
        ),
        grid_spec=pltpu.PrefetchScalarGridSpec(
            num_scalar_prefetch=0,
            grid=grid,
            in_specs=[
                pl.BlockSpec((cout_p, cin_p), lambda i, j: (0, 0)),
                pl.BlockSpec((None, cin_p, tile), lambda i, j: (i, 0, j)),
            ],
            out_specs=[
                pl.BlockSpec((None, cout_p, tile), lambda i, j: (i, 0, j)),
                pl.BlockSpec((None, cout_p, 1), lambda i, j: (i, 0, 0)),
                pl.BlockSpec((None, cout_p, 1), lambda i, j: (i, 0, 0)),
            ],
            scratch_shapes=[
                pltpu.VMEM((cout_p, 1), jnp.float32),
                pltpu.VMEM((cout_p, 1), jnp.float32),
            ],
        ),
        compiler_params=pltpu.CompilerParams(
            dimension_semantics=("parallel", "arbitrary"),
            vmem_limit_bytes=_VMEM_LIMIT_BYTES,
        ),
    )(w_p, x3)

    # ------------- tiny per-channel BN constants (plain JAX) ----------------
    m_valid = float(n * hw)        # padded pixels/channels contribute exactly 0
    sum_t = jnp.sum(psum, axis=0)[:cout, 0]
    sumsq_t = jnp.sum(psq, axis=0)[:cout, 0]
    mean_t = sum_t / m_valid
    var_t = jnp.maximum(sumsq_t / m_valid - mean_t * mean_t, 0.0)  # biased var
    a = gamma.astype(jnp.float32) * jax.lax.rsqrt(var_t + BN_EPS)
    c = beta.astype(jnp.float32) - a * mean_t
    a2 = a.reshape(cout, 1)
    c2 = c.reshape(cout, 1)

    # ------------- pass 2: out = relu(a*T + c), unpadded Cout, parallel ------
    out = pl.pallas_call(
        _bn_relu_kernel,
        out_shape=jax.ShapeDtypeStruct((n, cout, hw_p), jnp.float32),
        grid_spec=pltpu.PrefetchScalarGridSpec(
            num_scalar_prefetch=0,
            grid=grid,
            in_specs=[
                pl.BlockSpec((None, cout_p, tile), lambda i, j: (i, 0, j)),
                pl.BlockSpec((cout, 1), lambda i, j: (0, 0)),
                pl.BlockSpec((cout, 1), lambda i, j: (0, 0)),
            ],
            out_specs=pl.BlockSpec((None, cout, tile), lambda i, j: (i, 0, j)),
        ),
        compiler_params=pltpu.CompilerParams(
            dimension_semantics=("parallel", "parallel"),
            vmem_limit_bytes=_VMEM_LIMIT_BYTES,
        ),
    )(t_hbm, a2, c2)

    if hw_p != hw:
        out = out[:, :, :hw]
    return out.reshape(n, cout, h, w)


# --------------------------------------------------------------------------
# Pure-JAX references
# --------------------------------------------------------------------------
def reference_forward_f32(x, weight, bias, gamma, beta):
    y = jnp.einsum("nchw,oc->nohw", x, weight) + bias[None, :, None, None]
    mean = jnp.mean(y, axis=(0, 2, 3), keepdims=True)
    var = jnp.mean((y - mean) ** 2, axis=(0, 2, 3), keepdims=True)
    xhat = (y - mean) * jax.lax.rsqrt(var + BN_EPS)
    return jnp.maximum(
        gamma[None, :, None, None] * xhat + beta[None, :, None, None], 0.0)


def reference_matching(x, weight, gamma, beta):
    # Mirrors the kernel numerics: bf16 conv inputs with f32 accumulation,
    # stats from the f32 conv result, BN applied to the bf16-quantized T.
    t = jnp.einsum(
        "nchw,oc->nohw",
        x.astype(jnp.bfloat16),
        weight.astype(jnp.bfloat16),
        preferred_element_type=jnp.float32,
    )
    mean = jnp.mean(t, axis=(0, 2, 3))
    var = jnp.maximum(jnp.mean(t * t, axis=(0, 2, 3)) - mean * mean, 0.0)
    a = gamma * jax.lax.rsqrt(var + BN_EPS)
    c = beta - a * mean
    t_q = t.astype(jnp.bfloat16).astype(jnp.float32)
    return jnp.maximum(a[None, :, None, None] * t_q + c[None, :, None, None], 0.0)


if __name__ == "__main__":
    # Small shapes consistent with the module (numIn/numout configurable;
    # module default numout=6).
    N, CIN, H, W = 2, 32, 16, 16
    COUT = 6

    key = jax.random.PRNGKey(0)
    kx, kw, kb = jax.random.split(key, 3)

    x = jax.random.normal(kx, (N, CIN, H, W), dtype=jnp.float32)
    weight = jax.random.normal(kw, (COUT, CIN), dtype=jnp.float32) * (1.0 / CIN ** 0.5)
    bias = jax.random.normal(kb, (COUT,), dtype=jnp.float32) * 0.1
    gamma = jnp.ones((COUT,), dtype=jnp.float32)   # nn.BatchNorm2d default
    beta = jnp.zeros((COUT,), dtype=jnp.float32)   # nn.BatchNorm2d default

    fwd = jax.jit(lin_forward)
    out = jax.block_until_ready(fwd(x, weight, bias, gamma, beta))
    assert out.shape == (N, COUT, H, W)

    # Tight check vs a reference with identical numerics (bf16 conv + bf16 T).
    ref_m = reference_matching(x, weight, gamma, beta)
    assert jnp.allclose(out, ref_m, atol=5e-3, rtol=5e-3), "mismatch vs matching reference"

    # Looser sanity check vs the full-f32 reference (bf16 MXU inputs and the
    # bf16 T intermediate widen the error).
    ref_f = reference_forward_f32(x, weight, bias, gamma, beta)
    assert jnp.allclose(out, ref_f, atol=1e-1, rtol=1e-1), "mismatch vs f32 reference"

    print("KERNEL_OK")
</pallas_src>

<mosaic_0001>
module attributes {stable_mosaic.version = 11 : i64} {
  func.func @_conv_stats_kernel(%arg0: i32, %arg1: i32, %arg2: memref<8x32xbf16, #tpu.memory_space<vmem>>, %arg3: memref<1x32x256xf32, #tpu.memory_space<vmem>>, %arg4: memref<1x8x256xbf16, #tpu.memory_space<vmem>>, %arg5: memref<1x8x1xf32, #tpu.memory_space<vmem>>, %arg6: memref<1x8x1xf32, #tpu.memory_space<vmem>>, %arg7: memref<8x1xf32, #tpu.memory_space<vmem>>, %arg8: memref<8x1xf32, #tpu.memory_space<vmem>>) attributes {dimension_semantics = [#tpu.dimension_semantics<parallel>, #tpu.dimension_semantics<arbitrary>], iteration_bounds = array<i64: 2, 1>, scalar_prefetch = 0 : i64, scratch_operands = 2 : i64, tpu.core_type = #tpu.core_type<tc>, window_params = [{pipeline_mode = #tpu.pipeline_mode<synchronous>, transform_indices = @transform_0, window_bounds = array<i64: 8, 32>}, {transform_indices = @transform_1, window_bounds = array<i64: 1, 32, 256>}, {transform_indices = @transform_2, window_bounds = array<i64: 1, 8, 256>}, {transform_indices = @transform_3, window_bounds = array<i64: 1, 8, 1>}, {transform_indices = @transform_4, window_bounds = array<i64: 1, 8, 1>}]} {
    %c0_i32 = arith.constant 0 : i32
    %0 = arith.cmpi eq, %arg1, %c0_i32 : i32
    %1 = arith.extui %0 : i1 to i32
    %c0_i32_0 = arith.constant 0 : i32
    %2 = arith.cmpi ne, %1, %c0_i32_0 : i32
    scf.if %2 {
      %cst_20 = arith.constant 0.000000e+00 : f32
      %26 = vector.broadcast %cst_20 : f32 to vector<8x1xf32>
      %c0_21 = arith.constant 0 : index
      %c0_22 = arith.constant 0 : index
      %27 = vector.load %arg7[%c0_21, %c0_22] : memref<8x1xf32, #tpu.memory_space<vmem>>, vector<8x1xf32>
      tpu.vector_store %arg7[%c0_21, %c0_22], %26 {strides = array<i32>} : memref<8x1xf32, #tpu.memory_space<vmem>>, vector<8x1xf32>,
      %cst_23 = arith.constant 0.000000e+00 : f32
      %28 = vector.broadcast %cst_23 : f32 to vector<8x1xf32>
      %c0_24 = arith.constant 0 : index
      %c0_25 = arith.constant 0 : index
      %29 = vector.load %arg8[%c0_24, %c0_25] : memref<8x1xf32, #tpu.memory_space<vmem>>, vector<8x1xf32>
      tpu.vector_store %arg8[%c0_24, %c0_25], %28 {strides = array<i32>} : memref<8x1xf32, #tpu.memory_space<vmem>>, vector<8x1xf32>,
    } else {
    }
    %c0 = arith.constant 0 : index
    %c0_1 = arith.constant 0 : index
    %c0_2 = arith.constant 0 : index
    %3 = vector.load %arg3[%c0, %c0_1, %c0_2] : memref<1x32x256xf32, #tpu.memory_space<vmem>>, vector<1x32x256xf32>
    %4 = vector.shape_cast %3 : vector<1x32x256xf32> to vector<32x256xf32>
    %5 = arith.truncf %4 : vector<32x256xf32> to vector<32x256xbf16>
    %c0_3 = arith.constant 0 : index
    %c0_4 = arith.constant 0 : index
    %6 = vector.load %arg2[%c0_3, %c0_4] : memref<8x32xbf16, #tpu.memory_space<vmem>>, vector<8x32xbf16>
    %cst = arith.constant dense<0.000000e+00> : vector<8x256xf32>
    %7 = tpu.matmul %6, %5, %cst {dimension_numbers = #tpu.dot_dimension_numbers<[1], [0], [0], [1], [0, 0, 1, 1], [], []>} : vector<8x32xbf16>, vector<32x256xbf16>, vector<8x256xf32> -> vector<8x256xf32>
    %8 = arith.truncf %7 : vector<8x256xf32> to vector<8x256xbf16>
    %c0_5 = arith.constant 0 : index
    %c0_6 = arith.constant 0 : index
    %c0_7 = arith.constant 0 : index
    %9 = vector.load %arg4[%c0_5, %c0_6, %c0_7] : memref<1x8x256xbf16, #tpu.memory_space<vmem>>, vector<1x8x256xbf16>
    %10 = vector.shape_cast %9 : vector<1x8x256xbf16> to vector<8x256xbf16>
    %11 = vector.shape_cast %8 : vector<8x256xbf16> to vector<1x8x256xbf16>
    tpu.vector_store %arg4[%c0_5, %c0_6, %c0_7], %11 {strides = array<i32>} : memref<1x8x256xbf16, #tpu.memory_space<vmem>>, vector<1x8x256xbf16>,
    %c0_8 = arith.constant 0 : index
    %c0_9 = arith.constant 0 : index
    %12 = vector.load %arg7[%c0_8, %c0_9] : memref<8x1xf32, #tpu.memory_space<vmem>>, vector<8x1xf32>
    %cst_10 = arith.constant dense<0.000000e+00> : vector<8xf32>
    %13 = vector.multi_reduction <add>, %7, %cst_10 [1] : vector<8x256xf32> to vector<8xf32>
    %14 = vector.shape_cast %13 : vector<8xf32> to vector<8x1xf32>
    %15 = arith.addf %12, %14 : vector<8x1xf32>
    %c0_11 = arith.constant 0 : index
    %c0_12 = arith.constant 0 : index
    %16 = vector.load %arg7[%c0_11, %c0_12] : memref<8x1xf32, #tpu.memory_space<vmem>>, vector<8x1xf32>
    tpu.vector_store %arg7[%c0_11, %c0_12], %15 {strides = array<i32>} : memref<8x1xf32, #tpu.memory_space<vmem>>, vector<8x1xf32>,
    %c0_13 = arith.constant 0 : index
    %c0_14 = arith.constant 0 : index
    %17 = vector.load %arg8[%c0_13, %c0_14] : memref<8x1xf32, #tpu.memory_space<vmem>>, vector<8x1xf32>
    %18 = arith.mulf %7, %7 : vector<8x256xf32>
    %cst_15 = arith.constant dense<0.000000e+00> : vector<8xf32>
    %19 = vector.multi_reduction <add>, %18, %cst_15 [1] : vector<8x256xf32> to vector<8xf32>
    %20 = vector.shape_cast %19 : vector<8xf32> to vector<8x1xf32>
    %21 = arith.addf %17, %20 : vector<8x1xf32>
    %c0_16 = arith.constant 0 : index
    %c0_17 = arith.constant 0 : index
    %22 = vector.load %arg8[%c0_16, %c0_17] : memref<8x1xf32, #tpu.memory_space<vmem>>, vector<8x1xf32>
    tpu.vector_store %arg8[%c0_16, %c0_17], %21 {strides = array<i32>} : memref<8x1xf32, #tpu.memory_space<vmem>>, vector<8x1xf32>,
    %c0_i32_18 = arith.constant 0 : i32
    %23 = arith.cmpi eq, %arg1, %c0_i32_18 : i32
    %24 = arith.extui %23 : i1 to i32
    %c0_i32_19 = arith.constant 0 : i32
    %25 = arith.cmpi ne, %24, %c0_i32_19 : i32
    scf.if %25 {
      %c0_20 = arith.constant 0 : index
      %c0_21 = arith.constant 0 : index
      %26 = vector.load %arg7[%c0_20, %c0_21] : memref<8x1xf32, #tpu.memory_space<vmem>>, vector<8x1xf32>
      %c0_22 = arith.constant 0 : index
      %c0_23 = arith.constant 0 : index
      %c0_24 = arith.constant 0 : index
      %27 = vector.load %arg5[%c0_22, %c0_23, %c0_24] : memref<1x8x1xf32, #tpu.memory_space<vmem>>, vector<1x8x1xf32>
      %28 = vector.shape_cast %27 : vector<1x8x1xf32> to vector<8x1xf32>
      %29 = vector.shape_cast %26 : vector<8x1xf32> to vector<1x8x1xf32>
      tpu.vector_store %arg5[%c0_22, %c0_23, %c0_24], %29 {strides = array<i32>} : memref<1x8x1xf32, #tpu.memory_space<vmem>>, vector<1x8x1xf32>,
      %c0_25 = arith.constant 0 : index
      %c0_26 = arith.constant 0 : index
      %30 = vector.load %arg8[%c0_25, %c0_26] : memref<8x1xf32, #tpu.memory_space<vmem>>, vector<8x1xf32>
      %c0_27 = arith.constant 0 : index
      %c0_28 = arith.constant 0 : index
      %c0_29 = arith.constant 0 : index
      %31 = vector.load %arg6[%c0_27, %c0_28, %c0_29] : memref<1x8x1xf32, #tpu.memory_space<vmem>>, vector<1x8x1xf32>
      %32 = vector.shape_cast %31 : vector<1x8x1xf32> to vector<8x1xf32>
      %33 = vector.shape_cast %30 : vector<8x1xf32> to vector<1x8x1xf32>
      tpu.vector_store %arg6[%c0_27, %c0_28, %c0_29], %33 {strides = array<i32>} : memref<1x8x1xf32, #tpu.memory_space<vmem>>, vector<1x8x1xf32>,
    } else {
    }
    return
  }
  func.func @transform_0(%arg0: i32, %arg1: i32) -> (i32, i32) {
    %c0_i32 = arith.constant 0 : i32
    %c0_i32_0 = arith.constant 0 : i32
    %c0_i32_1 = arith.constant 0 : i32
    return %c0_i32, %c0_i32_0 : i32, i32
  }
  func.func @transform_1(%arg0: i32, %arg1: i32) -> (i32, i32, i32) {
    %c0_i32 = arith.constant 0 : i32
    %c0_i32_0 = arith.constant 0 : i32
    return %arg0, %c0_i32, %arg1 : i32, i32, i32
  }
  func.func @transform_2(%arg0: i32, %arg1: i32) -> (i32, i32, i32) {
    %c0_i32 = arith.constant 0 : i32
    %c0_i32_0 = arith.constant 0 : i32
    return %arg0, %c0_i32, %arg1 : i32, i32, i32
  }
  func.func @transform_3(%arg0: i32, %arg1: i32) -> (i32, i32, i32) {
    %c0_i32 = arith.constant 0 : i32
    %c0_i32_0 = arith.constant 0 : i32
    %c0_i32_1 = arith.constant 0 : i32
    return %arg0, %c0_i32, %c0_i32_0 : i32, i32, i32
  }
  func.func @transform_4(%arg0: i32, %arg1: i32) -> (i32, i32, i32) {
    %c0_i32 = arith.constant 0 : i32
    %c0_i32_0 = arith.constant 0 : i32
    %c0_i32_1 = arith.constant 0 : i32
    return %arg0, %c0_i32, %c0_i32_0 : i32, i32, i32
  }
}

module attributes {stable_mosaic.version = 11 : i64} {
  func.func @_bn_relu_kernel(%arg0: i32, %arg1: i32, %arg2: memref<1x8x256xbf16, #tpu.memory_space<vmem>>, %arg3: memref<6x1xf32, #tpu.memory_space<vmem>>, %arg4: memref<6x1xf32, #tpu.memory_space<vmem>>, %arg5: memref<1x6x256xf32, #tpu.memory_space<vmem>>) attributes {dimension_semantics = [#tpu.dimension_semantics<parallel>, #tpu.dimension_semantics<parallel>], iteration_bounds = array<i64: 2, 1>, scalar_prefetch = 0 : i64, scratch_operands = 0 : i64, tpu.core_type = #tpu.core_type<tc>, window_params = [{transform_indices = @transform_0, window_bounds = array<i64: 1, 8, 256>}, {pipeline_mode = #tpu.pipeline_mode<synchronous>, transform_indices = @transform_1, window_bounds = array<i64: 6, 1>}, {pipeline_mode = #tpu.pipeline_mode<synchronous>, transform_indices = @transform_2, window_bounds = array<i64: 6, 1>}, {transform_indices = @transform_3, window_bounds = array<i64: 1, 6, 256>}]} {
    %c0 = arith.constant 0 : index
    %c0_0 = arith.constant 0 : index
    %c0_1 = arith.constant 0 : index
    %0 = vector.load %arg2[%c0, %c0_0, %c0_1] : memref<1x8x256xbf16, #tpu.memory_space<vmem>>, vector<1x8x256xbf16>
    %1 = vector.shape_cast %0 : vector<1x8x256xbf16> to vector<8x256xbf16>
    %2 = arith.extf %1 : vector<8x256xbf16> to vector<8x256xf32>
    %3 = vector.extract_strided_slice %2 {offsets = [0, 0], sizes = [6, 256], strides = [1, 1]} : vector<8x256xf32> to vector<6x256xf32>
    %c0_2 = arith.constant 0 : index
    %c0_3 = arith.constant 0 : index
    %4 = vector.load %arg3[%c0_2, %c0_3] : memref<6x1xf32, #tpu.memory_space<vmem>>, vector<6x1xf32>
    %5 = vector.broadcast %4 : vector<6x1xf32> to vector<6x256xf32>
    %6 = arith.mulf %3, %5 : vector<6x256xf32>
    %c0_4 = arith.constant 0 : index
    %c0_5 = arith.constant 0 : index
    %7 = vector.load %arg4[%c0_4, %c0_5] : memref<6x1xf32, #tpu.memory_space<vmem>>, vector<6x1xf32>
    %8 = vector.broadcast %7 : vector<6x1xf32> to vector<6x256xf32>
    %9 = arith.addf %6, %8 : vector<6x256xf32>
    %cst = arith.constant 0.000000e+00 : f32
    %10 = vector.broadcast %cst : f32 to vector<6x256xf32>
    %11 = arith.maximumf %9, %10 : vector<6x256xf32>
    %c0_6 = arith.constant 0 : index
    %c0_7 = arith.constant 0 : index
    %c0_8 = arith.constant 0 : index
    %12 = vector.load %arg5[%c0_6, %c0_7, %c0_8] : memref<1x6x256xf32, #tpu.memory_space<vmem>>, vector<1x6x256xf32>
    %13 = vector.shape_cast %12 : vector<1x6x256xf32> to vector<6x256xf32>
    %14 = vector.shape_cast %11 : vector<6x256xf32> to vector<1x6x256xf32>
    tpu.vector_store %arg5[%c0_6, %c0_7, %c0_8], %14 {strides = array<i32>} : memref<1x6x256xf32, #tpu.memory_space<vmem>>, vector<1x6x256xf32>,
    return
  }
  func.func @transform_0(%arg0: i32, %arg1: i32) -> (i32, i32, i32) {
    %c0_i32 = arith.constant 0 : i32
    %c0_i32_0 = arith.constant 0 : i32
    return %arg0, %c0_i32, %arg1 : i32, i32, i32
  }
  func.func @transform_1(%arg0: i32, %arg1: i32) -> (i32, i32) {
    %c0_i32 = arith.constant 0 : i32
    %c0_i32_0 = arith.constant 0 : i32
    %c0_i32_1 = arith.constant 0 : i32
    return %c0_i32, %c0_i32_0 : i32, i32
  }
  func.func @transform_2(%arg0: i32, %arg1: i32) -> (i32, i32) {
    %c0_i32 = arith.constant 0 : i32
    %c0_i32_0 = arith.constant 0 : i32
    %c0_i32_1 = arith.constant 0 : i32
    return %c0_i32, %c0_i32_0 : i32, i32
  }
  func.func @transform_3(%arg0: i32, %arg1: i32) -> (i32, i32, i32) {
    %c0_i32 = arith.constant 0 : i32
    %c0_i32_0 = arith.constant 0 : i32
    return %arg0, %c0_i32, %arg1 : i32, i32, i32
  }
}

</mosaic_0001>

<llo_original>
// kernel: lin_forward.2
$region0: #{lin_forward.2}
  #allocation0 [shape = 'u32[]', space=smem, size = 0x4, offset = 0x4, fixed_abs, tag = 'smem constant byte address 0x4 - core index']
  #allocation1 [shape = 'u32[72,128]{1,0:T(1,128)}', space=vmem, size = 0x9000, scoped, tag = 'internal scratch']
  #allocation2 [shape = 'f32[8,1]{1,0:T(8,128)}', space=vmem, size = 0x1000, scoped, tag = 'scratch operand']
  #allocation3 [shape = 'f32[8,1]{1,0:T(8,128)}', space=vmem, size = 0x1000, scoped, tag = 'scratch operand']
  %s0 = inlined_call_operand.vmem [shape: bf16[8,32], index: 0, kind: input, shape index: {}]
  %s1 = inlined_call_operand.vmem [shape: f32[2,32,256], index: 1, kind: input, shape index: {}]
  %s2 = inlined_call_operand.vmem [shape: bf16[2,8,256], index: 2, kind: output, shape index: {0}]
  %s3 = inlined_call_operand.vmem [shape: f32[2,8,1], index: 3, kind: output, shape index: {1}]
  %s4 = inlined_call_operand.vmem [shape: f32[2,8,1], index: 4, kind: output, shape index: {2}]
  %5 = xla_tuple %s2, %s3, %s4
  %s6 = sld [smem:[#allocation0]]
  $region65: #{lin_forward.2} parent=0
    _
  %s8 = ssub.s32 1, %s6
  %s9 = scalar_select 0, %s8, %s6
  loop: start=0, step=1, limit=4
  $region2: #{lin_forward.2} parent=0 // loop_pre_header
    _
  $region3: #{lin_forward.2} parent=0 // loop_header
    %s11 = sphi 0, %s15
    %p12 = scmp.ge.s32.totalorder %s11, 4
    %s18 = sphi 0, %s30
    %s19 = sphi 0, %s26
    %s20 = sphi 0, %s18
    %s21 = sphi 0, %s19
    %s22 = sphi 0, %s20
    %s23 = sphi 0, %s21
    %s31 = sphi 0, %s31
    %s33 = sphi 0, %s31
    %s34 = sphi 0, %s33
    %s48 = sphi 0, %s34
    %s56 = sphi 0, %s58
    %s59 = sphi 0, %s56
    %s60 = sphi 0, %s59
    %s76 = sphi 0, %s60
    %s84 = sphi 0, %s86
    %s87 = sphi 0, %s84
    %s88 = sphi 0, %s87
    %s104 = sphi 0, %s88
    %s110 = sphi 0, %s112
    %s113 = sphi 0, %s110
    %s114 = sphi 0, %s113
    %s130 = sphi 0, %s114
    %s136 = sphi 0, %s138
    %s139 = sphi 0, %s136
    %s140 = sphi 0, %s139
    %s156 = sphi 0, %s140
  $region4: #{lin_forward.2} parent=0 // loop_header_branch
    %14 = sbr.rel (%p12) target = $region8
  $region5: #{lin_forward.2} parent=0 // loop_body
    %s16 = ssub.s32 %s11, 1
    %s17 = ssub.s32 %s11, 2
    %s24 = sadd.s32 1, %s19
    %p25 = scmp.ge.s32.totalorder %s24, 1
    %s26 = scalar_select %p25, 0, %s24
    %s27 = sadd.s32 1, %s18
    %s28 = scalar_select %p25, %s27, %s18
    %p29 = scmp.ge.s32.totalorder %s28, 2
    %s30 = scalar_select %p29, 0, %s28
    %s32 = sadd.s32 %s31, 1
    %p35 = scmp.eq.s32.totalorder %s11, 1
    %p36 = scmp.ne.s32.totalorder %s31, %s33
    %p37 = scmp.eq.s32.totalorder %s11, 0
    %p38 = por %p36, %p37
    %p39 = scmp.ne.s32.totalorder %s31, %s33
    %p40 = scmp.eq.s32.totalorder %s16, 1
    %p41 = por %p39, %p40
    %p42 = scmp.ne.s32.totalorder %s33, %s34
    %p43 = scmp.eq.s32.totalorder %s16, 0
    %p44 = por %p42, %p43
    %p45 = scmp.ne.s32.totalorder %s33, %s34
    %p46 = scmp.eq.s32.totalorder %s17, 1
    %p47 = por %p45, %p46
    %p49 = scmp.ne.s32.totalorder %s34, %s48
    %p50 = scmp.eq.s32.totalorder %s17, 0
    %p51 = por %p49, %p50
    %s52 = ssub.s32 %s18, %s30
    %s53 = ssub.s32 %s19, %s26
    %s54 = sor.u32 %s52, %s53
    %p55 = scmp.eq.s32.totalorder %s54, 0
    %s57 = sadd.s32 %s56, 1
    %s58 = scalar_select %p55, %s56, %s57
    %p61 = pneg %p55
    %p62 = scmp.eq.s32.totalorder %s11, 1
    %p63 = por %p61, %p62
    %p64 = scmp.ne.s32.totalorder %s56, %s59
    %p65 = scmp.eq.s32.totalorder %s11, 0
    %p66 = por %p64, %p65
    %p67 = scmp.ne.s32.totalorder %s56, %s59
    %p68 = scmp.eq.s32.totalorder %s16, 1
    %p69 = por %p67, %p68
    %p70 = scmp.ne.s32.totalorder %s59, %s60
    %p71 = scmp.eq.s32.totalorder %s16, 0
    %p72 = por %p70, %p71
    %p73 = scmp.ne.s32.totalorder %s59, %s60
    %p74 = scmp.eq.s32.totalorder %s17, 1
    %p75 = por %p73, %p74
    %p77 = scmp.ne.s32.totalorder %s60, %s76
    %p78 = scmp.eq.s32.totalorder %s17, 0
    %p79 = por %p77, %p78
    %s80 = ssub.s32 %s18, %s30
    %s81 = ssub.s32 %s19, %s26
    %s82 = sor.u32 %s80, %s81
    %p83 = scmp.eq.s32.totalorder %s82, 0
    %s85 = sadd.s32 %s84, 1
    %s86 = scalar_select %p83, %s84, %s85
    %p89 = pneg %p83
    %p90 = scmp.eq.s32.totalorder %s11, 1
    %p91 = por %p89, %p90
    %p92 = scmp.ne.s32.totalorder %s84, %s87
    %p93 = scmp.eq.s32.totalorder %s11, 0
    %p94 = por %p92, %p93
    %p95 = scmp.ne.s32.totalorder %s84, %s87
    %p96 = scmp.eq.s32.totalorder %s16, 1
    %p97 = por %p95, %p96
    %p98 = scmp.ne.s32.totalorder %s87, %s88
    %p99 = scmp.eq.s32.totalorder %s16, 0
    %p100 = por %p98, %p99
    %p101 = scmp.ne.s32.totalorder %s87, %s88
    %p102 = scmp.eq.s32.totalorder %s17, 1
    %p103 = por %p101, %p102
    %p105 = scmp.ne.s32.totalorder %s88, %s104
    %p106 = scmp.eq.s32.totalorder %s17, 0
    %p107 = por %p105, %p106
    %s108 = ssub.s32 %s18, %s30
    %p109 = scmp.eq.s32.totalorder %s108, 0
    %s111 = sadd.s32 %s110, 1
    %s112 = scalar_select %p109, %s110, %s111
    %p115 = pneg %p109
    %p116 = scmp.eq.s32.totalorder %s11, 1
    %p117 = por %p115, %p116
    %p118 = scmp.ne.s32.totalorder %s110, %s113
    %p119 = scmp.eq.s32.totalorder %s11, 0
    %p120 = por %p118, %p119
    %p121 = scmp.ne.s32.totalorder %s110, %s113
    %p122 = scmp.eq.s32.totalorder %s16, 1
    %p123 = por %p121, %p122
    %p124 = scmp.ne.s32.totalorder %s113, %s114
    %p125 = scmp.eq.s32.totalorder %s16, 0
    %p126 = por %p124, %p125
    %p127 = scmp.ne.s32.totalorder %s113, %s114
    %p128 = scmp.eq.s32.totalorder %s17, 1
    %p129 = por %p127, %p128
    %p131 = scmp.ne.s32.totalorder %s114, %s130
    %p132 = scmp.eq.s32.totalorder %s17, 0
    %p133 = por %p131, %p132
    %s134 = ssub.s32 %s18, %s30
    %p135 = scmp.eq.s32.totalorder %s134, 0
    %s137 = sadd.s32 %s136, 1
    %s138 = scalar_select %p135, %s136, %s137
    %p141 = pneg %p135
    %p142 = scmp.eq.s32.totalorder %s11, 1
    %p143 = por %p141, %p142
    %p144 = scmp.ne.s32.totalorder %s136, %s139
    %p145 = scmp.eq.s32.totalorder %s11, 0
    %p146 = por %p144, %p145
    %p147 = scmp.ne.s32.totalorder %s136, %s139
    %p148 = scmp.eq.s32.totalorder %s16, 1
    %p149 = por %p147, %p148
    %p150 = scmp.ne.s32.totalorder %s139, %s140
    %p151 = scmp.eq.s32.totalorder %s16, 0
    %p152 = por %p150, %p151
    %p153 = scmp.ne.s32.totalorder %s139, %s140
    %p154 = scmp.eq.s32.totalorder %s17, 1
    %p155 = por %p153, %p154
    %p157 = scmp.ne.s32.totalorder %s140, %s156
    %p158 = scmp.eq.s32.totalorder %s17, 0
    %p159 = por %p157, %p158
    %p160 = scmp.le.s32.totalorder 1, %s11
    %p161 = scmp.lt.s32.totalorder %s11, 3
    %p162 = pnand %p160, %p161
    %p163 = pneg %p162
    // Predicated region
    $region9: #{lin_forward.2} parent=5 // pred_check
      _
    $region10: #{lin_forward.2} parent=5 // pred_check_branch
      %165 = sbr.rel (%p162) target = $region12
    $region11: #{lin_forward.2} parent=5 // pred_region
      %s166 = ssub.s32 %s11, 1
      // Predicated region
      $region13: #{lin_forward.2} parent=11 // pred_check
        %p167 = pneg %p44
      $region14: #{lin_forward.2} parent=11 // pred_check_branch
        %169 = sbr.rel (%p167) target = $region16
      $region15: #{lin_forward.2} parent=11 // pred_region
        _
      $region16: #{lin_forward.2} parent=11 // pred_fallthru
        _
    $region12: #{lin_forward.2} parent=5 // pred_fallthru
      _
    %p170 = scmp.lt.s32.totalorder %s11, 2
    // Predicated region
    $region17: #{lin_forward.2} parent=5 // pred_check
      %p171 = pneg %p170
    $region18: #{lin_forward.2} parent=5 // pred_check_branch
      %173 = sbr.rel (%p171) target = $region20
    $region19: #{lin_forward.2} parent=5 // pred_region
      // Predicated region
      $region21: #{lin_forward.2} parent=19 // pred_check
        %p174 = pneg %p66
      $region22: #{lin_forward.2} parent=19 // pred_check_branch
        %176 = sbr.rel (%p174) target = $region24
      $region23: #{lin_forward.2} parent=19 // pred_region
        %s177 = smul.u32 2, %s19
        %p178 = scmp.lt.s32.totalorder %s18, 1
        %s179 = scalar_select %p178, %s18, 1
        %p180 = scmp.lt.s32.totalorder %s177, 1
        %s181 = scalar_select %p180, %s177, 1
        %s182 = smul.addr %s179, 8
        %s183 = sadd.s32 %s181, %s182
        %s184 = smul.addr %s183, 8
        %s185 = scalar_lea.vmem %s1, %s184
        %s186 = smul.u32 2, %s19
      $region24: #{lin_forward.2} parent=19 // pred_fallthru
        _
    $region20: #{lin_forward.2} parent=5 // pred_fallthru
      _
    %p187 = scmp.le.s32.totalorder 1, %s11
    %p188 = scmp.lt.s32.totalorder %s11, 3
    %p189 = pnand %p187, %p188
    %p190 = pneg %p189
    // Predicated region
    $region25: #{lin_forward.2} parent=5 // pred_check
      _
    $region26: #{lin_forward.2} parent=5 // pred_check_branch
      %192 = sbr.rel (%p189) target = $region28
    $region27: #{lin_forward.2} parent=5 // pred_region
      %s193 = ssub.s32 %s11, 1
      %p194 = pneg %p44
      %p195 = pneg %p41
      %s196 = smul.u32 2, %s21
      %p197 = scmp.lt.s32.totalorder %s20, 1
      %s198 = scalar_select %p197, %s20, 1
      %p199 = scmp.lt.s32.totalorder %s196, 1
      %s200 = scalar_select %p199, %s196, 1
      %s201 = smul.addr %s198, 8
      %s202 = sadd.s32 %s200, %s201
      %s203 = smul.addr %s202, 8
      %s204 = scalar_lea.vmem %s1, %s203
      %p205 = pneg %p72
      %p206 = pneg %p69
      %p207 = pneg %p100
      %p208 = pneg %p97
      %s209 = smul.u32 2, %s21
      %p210 = scmp.lt.s32.totalorder %s20, 1
      %s211 = scalar_select %p210, %s20, 1
      %p212 = scmp.lt.s32.totalorder %s209, 1
      %s213 = scalar_select %p212, %s209, 1
      %s214 = smul.addr %s211, 2
      %s215 = sadd.s32 %s213, %s214
      %s216 = smul.addr %s215, 4
      %s217 = scalar_lea.vmem %s2, %s216
      %p218 = pneg %p126
      %p219 = pneg %p123
      %p220 = scmp.lt.s32.totalorder %s20, 1
      %s221 = scalar_select %p220, %s20, 1
      %s222 = smul.addr %s221, 8
      %s223 = scalar_lea.vmem %s3, %s222
      %p224 = pneg %p152
      %p225 = pneg %p149
      %p226 = scmp.lt.s32.totalorder %s20, 1
      %s227 = scalar_select %p226, %s20, 1
      %s228 = smul.addr %s227, 8
      %s229 = scalar_lea.vmem %s4, %s228
      %s230 = smul.u32 2, %s21
      %p231 = scmp.lt.s32.totalorder %s20, 1
      %s232 = scalar_select %p231, %s20, 1
      %p233 = scmp.lt.s32.totalorder %s230, 1
      %s234 = scalar_select %p233, %s230, 1
      %s235 = smul.addr %s232, 8
      %s236 = sadd.s32 %s234, %s235
      %s237 = smul.addr %s236, 8
      %s238 = scalar_lea.vmem %s1, %s237
      %s239 = smul.u32 2, %s21
      %s240 = smul.u32 2, %s21
      %p241 = scmp.lt.s32.totalorder %s20, 1
      %s242 = scalar_select %p241, %s20, 1
      %p243 = scmp.lt.s32.totalorder %s240, 1
      %s244 = scalar_select %p243, %s240, 1
      %s245 = smul.addr %s242, 2
      %s246 = sadd.s32 %s244, %s245
      %s247 = smul.addr %s246, 4
      %s248 = scalar_lea.vmem %s2, %s247
      %s249 = smul.u32 2, %s21
      %p250 = scmp.lt.s32.totalorder %s20, 1
      %s251 = scalar_select %p250, %s20, 1
      %s252 = smul.addr %s251, 8
      %s253 = scalar_lea.vmem %s3, %s252
      %p254 = scmp.lt.s32.totalorder %s20, 1
      %s255 = scalar_select %p254, %s20, 1
      %s256 = smul.addr %s255, 8
      %s257 = scalar_lea.vmem %s4, %s256
      %p259 = scmp.eq.s32.totalorder %s21, 0
      // Predicated region
      $region29: #{lin_forward.2} parent=27 // pred_check
        %p260 = pneg %p259
      $region30: #{lin_forward.2} parent=27 // pred_check_branch
        %262 = sbr.rel (%p260) target = $region32
      $region31: #{lin_forward.2} parent=27 // pred_region
        %vm263 = vcmask 7168
        %264 = vst.msk [vmem:[#allocation2] sm:$0xff] %vm263, 0.0
        %265 = vst.msk [vmem:[#allocation3] sm:$0xff] %vm263, 0.0
      $region32: #{lin_forward.2} parent=27 // pred_fallthru
        _
      %v266 = vld [vmem:[%s238] sm:$0xff]
      %v267 = vld [vmem:[%s238 + $0x8] sm:$0xff]
      %v268 = vld [vmem:[%s238 + $0x10] sm:$0xff]
      %v269 = vld [vmem:[%s238 + $0x18] sm:$0xff]
      %v270 = vld [vmem:[%s238 + $0x20] sm:$0xff]
      %v271 = vld [vmem:[%s238 + $0x28] sm:$0xff]
      %v272 = vld [vmem:[%s238 + $0x30] sm:$0xff]
      %v273 = vld [vmem:[%s238 + $0x38] sm:$0xff]
      %v274 = vpack.c.bf16 %v268, %v266
      %v275 = vpack.c.bf16 %v269, %v267
      %v276 = vpack.c.bf16 %v272, %v270
      %v277 = vpack.c.bf16 %v273, %v271
      %v278 = vld [vmem:[%s0] sm:$0xf]
      %vm279 = vcmask 261120
      %v281 = vsel %vm279, %v278, 0
      %283 = vmatpush.bf16.msra.mxu0 0
      %284 = vmatpush.bf16.msra.mxu0 0
      %285 = vmatpush.bf16.msra.mxu0 0
      %286 = vmatpush.bf16.msra.mxu0 0
      %287 = vmatpush.bf16.msra.mxu0 0
      %288 = vmatpush.bf16.msra.mxu0 0
      %289 = vmatpush.bf16.msra.mxu0 %v276
      %290 = vmatpush.bf16.msra.mxu0 %v274
      %291 = vmatmul.bf16.gmra.mxu0 %v281
      %v292 = vpop.f32.mrf.mxu0
      %v293 = vadd.f32 0.0, %v292
      %v294 = vpop.f32.mrf.mxu0
      %295 = vdwg.mxu0
      %296 = vmatpush.bf16.msra.mxu0 0
      %297 = vmatpush.bf16.msra.mxu0 0
      %298 = vmatpush.bf16.msra.mxu0 0
      %299 = vmatpush.bf16.msra.mxu0 0
      %300 = vmatpush.bf16.msra.mxu0 0
      %301 = vmatpush.bf16.msra.mxu0 0
      %302 = vmatpush.bf16.msra.mxu0 %v277
      %303 = vmatpush.bf16.msra.mxu0 %v275
      %304 = vmatmul.bf16.gmra.mxu0 %v281
      %v305 = vpop.f32.mrf.mxu0
      %v306 = vadd.f32 0.0, %v305
      %v307 = vpop.f32.mrf.mxu0
      %308 = vdwg.mxu0
      %v309 = vpack.c.bf16 %v306, %v293
      %310 = vst [vmem:[%s248] sm:$0xff] %v309
      %v311 = vld [vmem:[#allocation2] sm:$0xff]
      %v312 = vadd.f32 %v293, %v306
      %313 = vadd.xlane.f32.xlu0 %v312
      %v314 = vpop.xlane.xlu0 %313
      %v315 = vadd.f32 %v311, %v314
      %vm316 = vcmask 7168
      %317 = vst.msk [vmem:[#allocation2] sm:$0xff] %vm316, %v315
      %v318 = vld [vmem:[#allocation3] sm:$0xff]
      %v319 = vmul.f32 %v293, %v293
      %v320 = vmul.f32 %v306, %v306
      %v321 = vadd.f32 %v319, %v320
      %322 = vadd.xlane.f32.xlu0 %v321
      %v323 = vpop.xlane.xlu0 %322
      %v324 = vadd.f32 %v318, %v323
      %325 = vst.msk [vmem:[#allocation3] sm:$0xff] %vm316, %v324
      // Predicated region
      $region33: #{lin_forward.2} parent=27 // pred_check
        %p326 = pneg %p259
      $region34: #{lin_forward.2} parent=27 // pred_check_branch
        %328 = sbr.rel (%p326) target = $region36
      $region35: #{lin_forward.2} parent=27 // pred_region
        %v329 = vld [vmem:[#allocation2] sm:$0xff]
        %330 = vst.msk [vmem:[%s253] sm:$0xff] %vm316, %v329
        %v331 = vld [vmem:[#allocation3] sm:$0xff]
        %332 = vst.msk [vmem:[%s257] sm:$0xff] %vm316, %v331
      $region36: #{lin_forward.2} parent=27 // pred_fallthru
        _
      %s333 = smul.u32 2, %s21
      %p334 = scmp.lt.s32.totalorder %s20, 1
      %s335 = scalar_select %p334, %s20, 1
      %p336 = scmp.lt.s32.totalorder %s333, 1
      %s337 = scalar_select %p336, %s333, 1
      %s338 = smul.addr %s335, 2
      %s339 = sadd.s32 %s337, %s338
      %s340 = smul.addr %s339, 4
      %s341 = scalar_lea.vmem %s2, %s340
      %p342 = scmp.lt.s32.totalorder %s20, 1
      %s343 = scalar_select %p342, %s20, 1
      %s344 = smul.addr %s343, 8
      %s345 = scalar_lea.vmem %s3, %s344
      %p346 = scmp.lt.s32.totalorder %s20, 1
      %s347 = scalar_select %p346, %s20, 1
      %s348 = smul.addr %s347, 8
      %s349 = scalar_lea.vmem %s4, %s348
      // Predicated region
      $region37: #{lin_forward.2} parent=27 // pred_check
        %p350 = pneg %p97
      $region38: #{lin_forward.2} parent=27 // pred_check_branch
        %352 = sbr.rel (%p350) target = $region40
      $region39: #{lin_forward.2} parent=27 // pred_region
        %s353 = smul.u32 2, %s21
      $region40: #{lin_forward.2} parent=27 // pred_fallthru
        _
      // Predicated region
      $region41: #{lin_forward.2} parent=27 // pred_check
        %p354 = pneg %p123
      $region42: #{lin_forward.2} parent=27 // pred_check_branch
        %356 = sbr.rel (%p354) target = $region44
      $region43: #{lin_forward.2} parent=27 // pred_region
        _
      $region44: #{lin_forward.2} parent=27 // pred_fallthru
        _
      // Predicated region
      $region45: #{lin_forward.2} parent=27 // pred_check
        %p357 = pneg %p149
      $region46: #{lin_forward.2} parent=27 // pred_check_branch
        %359 = sbr.rel (%p357) target = $region48
      $region47: #{lin_forward.2} parent=27 // pred_region
        _
      $region48: #{lin_forward.2} parent=27 // pred_fallthru
        _
    $region28: #{lin_forward.2} parent=5 // pred_fallthru
      _
    %p360 = scmp.le.s32.totalorder 2, %s11
    // Predicated region
    $region49: #{lin_forward.2} parent=5 // pred_check
      %p361 = pneg %p360
    $region50: #{lin_forward.2} parent=5 // pred_check_branch
      %363 = sbr.rel (%p361) target = $region52
    $region51: #{lin_forward.2} parent=5 // pred_region
      %s364 = ssub.s32 %s11, 2
      // Predicated region
      $region53: #{lin_forward.2} parent=51 // pred_check
        %p365 = pneg %p103
      $region54: #{lin_forward.2} parent=51 // pred_check_branch
        %367 = sbr.rel (%p365) target = $region56
      $region55: #{lin_forward.2} parent=51 // pred_region
        %s368 = smul.u32 2, %s23
        %p369 = scmp.lt.s32.totalorder %s22, 1
        %s370 = scalar_select %p369, %s22, 1
        %p371 = scmp.lt.s32.totalorder %s368, 1
        %s372 = scalar_select %p371, %s368, 1
        %s373 = smul.addr %s370, 2
        %s374 = sadd.s32 %s372, %s373
        %s375 = smul.addr %s374, 4
        %s376 = scalar_lea.vmem %s2, %s375
      $region56: #{lin_forward.2} parent=51 // pred_fallthru
        _
      // Predicated region
      $region57: #{lin_forward.2} parent=51 // pred_check
        %p377 = pneg %p129
      $region58: #{lin_forward.2} parent=51 // pred_check_branch
        %379 = sbr.rel (%p377) target = $region60
      $region59: #{lin_forward.2} parent=51 // pred_region
        %p380 = scmp.lt.s32.totalorder %s22, 1
        %s381 = scalar_select %p380, %s22, 1
        %s382 = smul.addr %s381, 8
        %s383 = scalar_lea.vmem %s3, %s382
      $region60: #{lin_forward.2} parent=51 // pred_fallthru
        _
      // Predicated region
      $region61: #{lin_forward.2} parent=51 // pred_check
        %p384 = pneg %p155
      $region62: #{lin_forward.2} parent=51 // pred_check_branch
        %386 = sbr.rel (%p384) target = $region64
      $region63: #{lin_forward.2} parent=51 // pred_region
        %p387 = scmp.lt.s32.totalorder %s22, 1
        %s388 = scalar_select %p387, %s22, 1
        %s389 = smul.addr %s388, 8
        %s390 = scalar_lea.vmem %s4, %s389
      $region64: #{lin_forward.2} parent=51 // pred_fallthru
        _
    $region52: #{lin_forward.2} parent=5 // pred_fallthru
      _
  $region6: #{lin_forward.2} parent=0 // loop_footer
    %s15 = sadd.s32 1, %s11
  $region7: #{lin_forward.2} parent=0 // loop_footer_branch
    %10 = sbr.rel target = $region3
  $region8: #{lin_forward.2} parent=0 // loop_exit
    _

// kernel: lin_forward.3
$region0: #{lin_forward.3}
  #allocation0 [shape = 'u32[]', space=smem, size = 0x4, offset = 0x4, fixed_abs, tag = 'smem constant byte address 0x4 - core index']
  #allocation1 [shape = 'u32[72,128]{1,0:T(1,128)}', space=vmem, size = 0x9000, scoped, tag = 'internal scratch']
  %s0 = inlined_call_operand.vmem [shape: bf16[2,8,256], index: 0, kind: input, shape index: {}]
  %s1 = inlined_call_operand.vmem [shape: f32[6,1], index: 1, kind: input, shape index: {}]
  %s2 = inlined_call_operand.vmem [shape: f32[6,1], index: 2, kind: input, shape index: {}]
  %s3 = inlined_call_operand.vmem [shape: f32[2,6,256], index: 3, kind: output, shape index: {}]
  %s4 = sld [smem:[#allocation0]]
  $region45: #{lin_forward.3} parent=0
    _
  %s6 = ssub.s32 1, %s4
  %s7 = scalar_select 0, %s6, %s4
  loop: start=0, step=1, limit=4
  $region2: #{lin_forward.3} parent=0 // loop_pre_header
    _
  $region3: #{lin_forward.3} parent=0 // loop_header
    %s9 = sphi 0, %s13
    %p10 = scmp.ge.s32.totalorder %s9, 4
    %s16 = sphi 0, %s28
    %s17 = sphi 0, %s24
    %s18 = sphi 0, %s16
    %s19 = sphi 0, %s17
    %s20 = sphi 0, %s18
    %s21 = sphi 0, %s19
    %s33 = sphi 0, %s35
    %s36 = sphi 0, %s33
    %s37 = sphi 0, %s36
    %s53 = sphi 0, %s37
    %s57 = sphi 0, %s57
    %s59 = sphi 0, %s57
    %s60 = sphi 0, %s59
    %s74 = sphi 0, %s60
    %s78 = sphi 0, %s78
    %s80 = sphi 0, %s78
    %s81 = sphi 0, %s80
    %s95 = sphi 0, %s81
    %s103 = sphi 0, %s105
    %s106 = sphi 0, %s103
    %s107 = sphi 0, %s106
    %s123 = sphi 0, %s107
  $region4: #{lin_forward.3} parent=0 // loop_header_branch
    %12 = sbr.rel (%p10) target = $region8
  $region5: #{lin_forward.3} parent=0 // loop_body
    %s14 = ssub.s32 %s9, 1
    %s15 = ssub.s32 %s9, 2
    %s22 = sadd.s32 1, %s17
    %p23 = scmp.ge.s32.totalorder %s22, 1
    %s24 = scalar_select %p23, 0, %s22
    %s25 = sadd.s32 1, %s16
    %s26 = scalar_select %p23, %s25, %s16
    %p27 = scmp.ge.s32.totalorder %s26, 2
    %s28 = scalar_select %p27, 0, %s26
    %s29 = ssub.s32 %s16, %s28
    %s30 = ssub.s32 %s17, %s24
    %s31 = sor.u32 %s29, %s30
    %p32 = scmp.eq.s32.totalorder %s31, 0
    %s34 = sadd.s32 %s33, 1
    %s35 = scalar_select %p32, %s33, %s34
    %p38 = pneg %p32
    %p39 = scmp.eq.s32.totalorder %s9, 1
    %p40 = por %p38, %p39
    %p41 = scmp.ne.s32.totalorder %s33, %s36
    %p42 = scmp.eq.s32.totalorder %s9, 0
    %p43 = por %p41, %p42
    %p44 = scmp.ne.s32.totalorder %s33, %s36
    %p45 = scmp.eq.s32.totalorder %s14, 1
    %p46 = por %p44, %p45
    %p47 = scmp.ne.s32.totalorder %s36, %s37
    %p48 = scmp.eq.s32.totalorder %s14, 0
    %p49 = por %p47, %p48
    %p50 = scmp.ne.s32.totalorder %s36, %s37
    %p51 = scmp.eq.s32.totalorder %s15, 1
    %p52 = por %p50, %p51
    %p54 = scmp.ne.s32.totalorder %s37, %s53
    %p55 = scmp.eq.s32.totalorder %s15, 0
    %p56 = por %p54, %p55
    %s58 = sadd.s32 %s57, 1
    %p61 = scmp.eq.s32.totalorder %s9, 1
    %p62 = scmp.ne.s32.totalorder %s57, %s59
    %p63 = scmp.eq.s32.totalorder %s9, 0
    %p64 = por %p62, %p63
    %p65 = scmp.ne.s32.totalorder %s57, %s59
    %p66 = scmp.eq.s32.totalorder %s14, 1
    %p67 = por %p65, %p66
    %p68 = scmp.ne.s32.totalorder %s59, %s60
    %p69 = scmp.eq.s32.totalorder %s14, 0
    %p70 = por %p68, %p69
    %p71 = scmp.ne.s32.totalorder %s59, %s60
    %p72 = scmp.eq.s32.totalorder %s15, 1
    %p73 = por %p71, %p72
    %p75 = scmp.ne.s32.totalorder %s60, %s74
    %p76 = scmp.eq.s32.totalorder %s15, 0
    %p77 = por %p75, %p76
    %s79 = sadd.s32 %s78, 1
    %p82 = scmp.eq.s32.totalorder %s9, 1
    %p83 = scmp.ne.s32.totalorder %s78, %s80
    %p84 = scmp.eq.s32.totalorder %s9, 0
    %p85 = por %p83, %p84
    %p86 = scmp.ne.s32.totalorder %s78, %s80
    %p87 = scmp.eq.s32.totalorder %s14, 1
    %p88 = por %p86, %p87
    %p89 = scmp.ne.s32.totalorder %s80, %s81
    %p90 = scmp.eq.s32.totalorder %s14, 0
    %p91 = por %p89, %p90
    %p92 = scmp.ne.s32.totalorder %s80, %s81
    %p93 = scmp.eq.s32.totalorder %s15, 1
    %p94 = por %p92, %p93
    %p96 = scmp.ne.s32.totalorder %s81, %s95
    %p97 = scmp.eq.s32.totalorder %s15, 0
    %p98 = por %p96, %p97
    %s99 = ssub.s32 %s16, %s28
    %s100 = ssub.s32 %s17, %s24
    %s101 = sor.u32 %s99, %s100
    %p102 = scmp.eq.s32.totalorder %s101, 0
    %s104 = sadd.s32 %s103, 1
    %s105 = scalar_select %p102, %s103, %s104
    %p108 = pneg %p102
    %p109 = scmp.eq.s32.totalorder %s9, 1
    %p110 = por %p108, %p109
    %p111 = scmp.ne.s32.totalorder %s103, %s106
    %p112 = scmp.eq.s32.totalorder %s9, 0
    %p113 = por %p111, %p112
    %p114 = scmp.ne.s32.totalorder %s103, %s106
    %p115 = scmp.eq.s32.totalorder %s14, 1
    %p116 = por %p114, %p115
    %p117 = scmp.ne.s32.totalorder %s106, %s107
    %p118 = scmp.eq.s32.totalorder %s14, 0
    %p119 = por %p117, %p118
    %p120 = scmp.ne.s32.totalorder %s106, %s107
    %p121 = scmp.eq.s32.totalorder %s15, 1
    %p122 = por %p120, %p121
    %p124 = scmp.ne.s32.totalorder %s107, %s123
    %p125 = scmp.eq.s32.totalorder %s15, 0
    %p126 = por %p124, %p125
    %p127 = scmp.le.s32.totalorder 1, %s9
    %p128 = scmp.lt.s32.totalorder %s9, 3
    %p129 = pnand %p127, %p128
    %p130 = pneg %p129
    // Predicated region
    $region9: #{lin_forward.3} parent=5 // pred_check
      _
    $region10: #{lin_forward.3} parent=5 // pred_check_branch
      %132 = sbr.rel (%p129) target = $region12
    $region11: #{lin_forward.3} parent=5 // pred_region
      %s133 = ssub.s32 %s9, 1
      // Predicated region
      $region13: #{lin_forward.3} parent=11 // pred_check
        %p134 = pneg %p70
      $region14: #{lin_forward.3} parent=11 // pred_check_branch
        %136 = sbr.rel (%p134) target = $region16
      $region15: #{lin_forward.3} parent=11 // pred_region
        _
      $region16: #{lin_forward.3} parent=11 // pred_fallthru
        _
      // Predicated region
      $region17: #{lin_forward.3} parent=11 // pred_check
        %p137 = pneg %p91
      $region18: #{lin_forward.3} parent=11 // pred_check_branch
        %139 = sbr.rel (%p137) target = $region20
      $region19: #{lin_forward.3} parent=11 // pred_region
        _
      $region20: #{lin_forward.3} parent=11 // pred_fallthru
        _
    $region12: #{lin_forward.3} parent=5 // pred_fallthru
      _
    %p140 = scmp.lt.s32.totalorder %s9, 2
    // Predicated region
    $region21: #{lin_forward.3} parent=5 // pred_check
      %p141 = pneg %p140
    $region22: #{lin_forward.3} parent=5 // pred_check_branch
      %143 = sbr.rel (%p141) target = $region24
    $region23: #{lin_forward.3} parent=5 // pred_region
      // Predicated region
      $region25: #{lin_forward.3} parent=23 // pred_check
        %p144 = pneg %p43
      $region26: #{lin_forward.3} parent=23 // pred_check_branch
        %146 = sbr.rel (%p144) target = $region28
      $region27: #{lin_forward.3} parent=23 // pred_region
        %s147 = smul.u32 2, %s17
        %p148 = scmp.lt.s32.totalorder %s16, 1
        %s149 = scalar_select %p148, %s16, 1
        %p150 = scmp.lt.s32.totalorder %s147, 1
        %s151 = scalar_select %p150, %s147, 1
        %s152 = smul.addr %s149, 2
        %s153 = sadd.s32 %s151, %s152
        %s154 = smul.addr %s153, 4
        %s155 = scalar_lea.vmem %s0, %s154
        %s156 = smul.u32 2, %s17
      $region28: #{lin_forward.3} parent=23 // pred_fallthru
        _
    $region24: #{lin_forward.3} parent=5 // pred_fallthru
      _
    %p157 = scmp.le.s32.totalorder 1, %s9
    %p158 = scmp.lt.s32.totalorder %s9, 3
    %p159 = pnand %p157, %p158
    %p160 = pneg %p159
    // Predicated region
    $region29: #{lin_forward.3} parent=5 // pred_check
      _
    $region30: #{lin_forward.3} parent=5 // pred_check_branch
      %162 = sbr.rel (%p159) target = $region32
    $region31: #{lin_forward.3} parent=5 // pred_region
      %s163 = ssub.s32 %s9, 1
      %s164 = smul.u32 2, %s19
      %p165 = scmp.lt.s32.totalorder %s18, 1
      %s166 = scalar_select %p165, %s18, 1
      %p167 = scmp.lt.s32.totalorder %s164, 1
      %s168 = scalar_select %p167, %s164, 1
      %s169 = smul.addr %s166, 2
      %s170 = sadd.s32 %s168, %s169
      %s171 = smul.addr %s170, 4
      %s172 = scalar_lea.vmem %s0, %s171
      %p173 = pneg %p49
      %p174 = pneg %p46
      %p175 = pneg %p70
      %p176 = pneg %p67
      %p177 = pneg %p91
      %p178 = pneg %p88
      %p179 = pneg %p119
      %p180 = pneg %p116
      %s181 = smul.u32 2, %s19
      %p182 = scmp.lt.s32.totalorder %s18, 1
      %s183 = scalar_select %p182, %s18, 1
      %p184 = scmp.lt.s32.totalorder %s181, 1
      %s185 = scalar_select %p184, %s181, 1
      %s186 = smul.addr %s183, 2
      %s187 = sadd.s32 %s185, %s186
      %s188 = smul.addr %s187, 8
      %s189 = scalar_lea.vmem %s3, %s188
      %s190 = smul.u32 2, %s19
      %p191 = scmp.lt.s32.totalorder %s18, 1
      %s192 = scalar_select %p191, %s18, 1
      %p193 = scmp.lt.s32.totalorder %s190, 1
      %s194 = scalar_select %p193, %s190, 1
      %s195 = smul.addr %s192, 2
      %s196 = sadd.s32 %s194, %s195
      %s197 = smul.addr %s196, 4
      %s198 = scalar_lea.vmem %s0, %s197
      %s199 = smul.u32 2, %s19
      %s200 = smul.u32 2, %s19
      %p201 = scmp.lt.s32.totalorder %s18, 1
      %s202 = scalar_select %p201, %s18, 1
      %p203 = scmp.lt.s32.totalorder %s200, 1
      %s204 = scalar_select %p203, %s200, 1
      %s205 = smul.addr %s202, 2
      %s206 = sadd.s32 %s204, %s205
      %s207 = smul.addr %s206, 8
      %s208 = scalar_lea.vmem %s3, %s207
      %s209 = smul.u32 2, %s19
      %v210 = vld [vmem:[%s198] sm:$0xff]
      %v211 = vunpack.c.l.bf16 %v210
      %v212 = vunpack.c.h.bf16 %v210
      %v213 = vld [vmem:[%s1] sm:$0x3f]
      %215 = vset.pattern.permute.xlu0 0
      %216 = vperm.xlu0 %215, %v213
      %v217 = vpop.permute.xlu0 %216
      %v219 = vmul.f32 %v211, %v217
      %v220 = vmul.f32 %v212, %v217
      %v221 = vld [vmem:[%s2] sm:$0x3f]
      %223 = vset.pattern.permute.xlu0 0
      %224 = vperm.xlu0 %223, %v221
      %v225 = vpop.permute.xlu0 %224
      %v227 = vadd.f32 %v219, %v225
      %v228 = vadd.f32 %v220, %v225
      %v229 = vmax.f32 %v227, 0.0
      %v230 = vmax.f32 %v228, 0.0
      %231 = vst [vmem:[%s208] sm:$0x3f] %v229
      %232 = vst [vmem:[%s208 + $0x8] sm:$0x3f] %v230
      %s233 = smul.u32 2, %s19
      %p234 = scmp.lt.s32.totalorder %s18, 1
      %s235 = scalar_select %p234, %s18, 1
      %p236 = scmp.lt.s32.totalorder %s233, 1
      %s237 = scalar_select %p236, %s233, 1
      %s238 = smul.addr %s235, 2
      %s239 = sadd.s32 %s237, %s238
      %s240 = smul.addr %s239, 8
      %s241 = scalar_lea.vmem %s3, %s240
      // Predicated region
      $region33: #{lin_forward.3} parent=31 // pred_check
        %p242 = pneg %p116
      $region34: #{lin_forward.3} parent=31 // pred_check_branch
        %244 = sbr.rel (%p242) target = $region36
      $region35: #{lin_forward.3} parent=31 // pred_region
        %s245 = smul.u32 2, %s19
      $region36: #{lin_forward.3} parent=31 // pred_fallthru
        _
    $region32: #{lin_forward.3} parent=5 // pred_fallthru
      _
    %p246 = scmp.le.s32.totalorder 2, %s9
    // Predicated region
    $region37: #{lin_forward.3} parent=5 // pred_check
      %p247 = pneg %p246
    $region38: #{lin_forward.3} parent=5 // pred_check_branch
      %249 = sbr.rel (%p247) target = $region40
    $region39: #{lin_forward.3} parent=5 // pred_region
      %s250 = ssub.s32 %s9, 2
      // Predicated region
      $region41: #{lin_forward.3} parent=39 // pred_check
        %p251 = pneg %p122
      $region42: #{lin_forward.3} parent=39 // pred_check_branch
        %253 = sbr.rel (%p251) target = $region44
      $region43: #{lin_forward.3} parent=39 // pred_region
        %s254 = smul.u32 2, %s21
        %p255 = scmp.lt.s32.totalorder %s20, 1
        %s256 = scalar_select %p255, %s20, 1
        %p257 = scmp.lt.s32.totalorder %s254, 1
        %s258 = scalar_select %p257, %s254, 1
        %s259 = smul.addr %s256, 2
        %s260 = sadd.s32 %s258, %s259
        %s261 = smul.addr %s260, 8
        %s262 = scalar_lea.vmem %s3, %s261
      $region44: #{lin_forward.3} parent=39 // pred_fallthru
        _
    $region40: #{lin_forward.3} parent=5 // pred_fallthru
      _
  $region6: #{lin_forward.3} parent=0 // loop_footer
    %s13 = sadd.s32 1, %s9
  $region7: #{lin_forward.3} parent=0 // loop_footer_branch
    %8 = sbr.rel target = $region3
  $region8: #{lin_forward.3} parent=0 // loop_exit
    _

</llo_original>
